<compile_context>
chip_gen: v7x
topology: tpu7x:2x2x1
jax: 0.10.0
libtpu: 0.0.40
codegen_flags: <defaults>
</compile_context>

<pallas_src>
import functools

import jax
import jax.numpy as jnp
from jax import lax
from jax.experimental import pallas as pl
from jax.experimental.pallas import tpu as pltpu


def _round_up(x, m):
    return ((x + m - 1) // m) * m


def _agg_norm_kernel(x_ref, w_ref, b_ref, o_ref, *, txtnorm: bool):
    """Fused Linear(H->E) + bias + (optional) L2 normalize over last dim."""
    # Feed native dtypes straight to the MXU; accumulate in f32.
    y = jnp.dot(x_ref[...], w_ref[...],
                preferred_element_type=jnp.float32)            # (TM, Ep) f32
    y = y + b_ref[...].astype(jnp.float32)                     # bias broadcast
    if txtnorm:
        # torch.nn.functional.normalize(p=2, dim=-1, eps=1e-12):
        #   y / max(||y||_2, 1e-12)  ==  y * rsqrt(max(sum(y^2), 1e-24))
        sumsq = jnp.sum(y * y, axis=-1, keepdims=True)
        y = y * lax.rsqrt(jnp.maximum(sumsq, 1e-24))           # EUP rsqrt
    o_ref[...] = y.astype(o_ref.dtype)


def text_encoder_fc(last_hidden, weight, bias, *, txtnorm=True, tm=256):
    """TextEncoder forward (fc aggregation branch).

    last_hidden: (B, S, H)  -- BERT last encoder layer output
    weight:      (H, E)     -- nn.Linear weight, transposed to (in, out)
    bias:        (E,)
    returns:     (B, S, E)
    """
    B, S, H = last_hidden.shape
    E = weight.shape[1]
    M = B * S

    # Large MXU-friendly row tile; pad M up to a multiple of the tile.
    TM = min(tm, _round_up(M, 8))
    M_pad = _round_up(M, TM)
    # Lane-dense output: pad E to a multiple of 128 (zeros -> norm unaffected).
    E_pad = _round_up(E, 128)

    x2 = last_hidden.reshape(M, H)
    if M_pad != M:
        x2 = jnp.pad(x2, ((0, M_pad - M), (0, 0)))
    w2 = weight
    b2 = bias.reshape(1, E)
    if E_pad != E:
        w2 = jnp.pad(w2, ((0, 0), (0, E_pad - E)))
        b2 = jnp.pad(b2, ((0, 0), (0, E_pad - E)))

    grid = (M_pad // TM,)
    kernel = functools.partial(_agg_norm_kernel, txtnorm=txtnorm)

    xb = x2.dtype.itemsize
    wb = w2.dtype.itemsize
    ob = last_hidden.dtype.itemsize
    # Double-buffered activation/output tiles + resident weight/bias (+ f32 acc).
    needed = (2 * TM * (H * xb + E_pad * ob)
              + 2 * H * E_pad * wb + 2 * E_pad * wb
              + TM * E_pad * 4)
    vmem_limit = int(min(max(2 * needed + (4 << 20), 32 << 20), 64 << 20))

    out2 = pl.pallas_call(
        kernel,
        out_shape=jax.ShapeDtypeStruct((M_pad, E_pad), last_hidden.dtype),
        grid_spec=pltpu.PrefetchScalarGridSpec(
            num_scalar_prefetch=0,
            grid=grid,
            in_specs=[
                pl.BlockSpec((TM, H), lambda i: (i, 0)),      # activation tile
                pl.BlockSpec((H, E_pad), lambda i: (0, 0)),   # resident weight
                pl.BlockSpec((1, E_pad), lambda i: (0, 0)),   # resident bias
            ],
            out_specs=pl.BlockSpec((TM, E_pad), lambda i: (i, 0)),
        ),
        compiler_params=pltpu.CompilerParams(
            dimension_semantics=("parallel",),
            vmem_limit_bytes=vmem_limit,
        ),
        cost_estimate=pl.CostEstimate(
            flops=2 * M_pad * H * E_pad,
            transcendentals=M_pad if txtnorm else 0,
            bytes_accessed=(M_pad * H * xb + H * E_pad * wb
                            + E_pad * wb + M_pad * E_pad * ob),
        ),
    )(x2, w2, b2)

    out2 = out2[:M, :E]
    return out2.reshape(B, S, E)


def _ref_forward(last_hidden, weight, bias, txtnorm=True):
    """Pure-JAX reference for correctness checking."""
    y = jnp.einsum("bsh,he->bse", last_hidden.astype(jnp.float32),
                   weight.astype(jnp.float32)) + bias.astype(jnp.float32)
    if txtnorm:
        nrm = jnp.sqrt(jnp.sum(y * y, axis=-1, keepdims=True))
        y = y / jnp.maximum(nrm, 1e-12)
    return y.astype(last_hidden.dtype)


if __name__ == "__main__":
    # Small, module-consistent shapes:
    #   batch B=2, seq S=8, bert_hid H=32, embed_size E=32
    B, S, H, E = 2, 8, 32, 32

    key = jax.random.PRNGKey(0)
    k_x, k_w, k_b = jax.random.split(key, 3)

    # Stand-in for all_encoder_layers[-1] from BERT (checkpoint not loaded).
    last_hidden = jax.random.normal(k_x, (B, S, H), dtype=jnp.float32)

    # nn.Linear(bert_hid, embed_size) init (uniform +/- 1/sqrt(H)),
    # stored transposed as (in, out) for the kernel.
    bound = 1.0 / (H ** 0.5)
    weight = jax.random.uniform(k_w, (H, E), dtype=jnp.float32,
                                minval=-bound, maxval=bound)
    bias = jax.random.uniform(k_b, (E,), dtype=jnp.float32,
                              minval=-bound, maxval=bound)

    out = text_encoder_fc(last_hidden, weight, bias, txtnorm=True)
    out = jax.block_until_ready(out)

    ref = _ref_forward(last_hidden, weight, bias, txtnorm=True)
    assert out.shape == (B, S, E), out.shape
    assert jnp.allclose(out, ref, atol=1e-5, rtol=1e-5), \
        float(jnp.max(jnp.abs(out - ref)))

    print("KERNEL_OK")
</pallas_src>

<mosaic_0001>
module attributes {stable_mosaic.version = 11 : i64} {
  func.func @_agg_norm_kernel(%arg0: i32, %arg1: memref<16x32xf32, #tpu.memory_space<vmem>>, %arg2: memref<32x128xf32, #tpu.memory_space<vmem>>, %arg3: memref<1x128xf32, #tpu.memory_space<vmem>>, %arg4: memref<16x128xf32, #tpu.memory_space<vmem>>) attributes {dimension_semantics = [#tpu.dimension_semantics<parallel>], iteration_bounds = array<i64: 1>, scalar_prefetch = 0 : i64, scratch_operands = 0 : i64, tpu.core_type = #tpu.core_type<tc>, window_params = [{transform_indices = @transform_0, window_bounds = array<i64: 16, 32>}, {pipeline_mode = #tpu.pipeline_mode<synchronous>, transform_indices = @transform_1, window_bounds = array<i64: 32, 128>}, {pipeline_mode = #tpu.pipeline_mode<synchronous>, transform_indices = @transform_2, window_bounds = array<i64: 1, 128>}, {transform_indices = @transform_3, window_bounds = array<i64: 16, 128>}]} {
    %c0 = arith.constant 0 : index
    %c0_0 = arith.constant 0 : index
    %0 = vector.load %arg1[%c0, %c0_0] : memref<16x32xf32, #tpu.memory_space<vmem>>, vector<16x32xf32>
    %c0_1 = arith.constant 0 : index
    %c0_2 = arith.constant 0 : index
    %1 = vector.load %arg2[%c0_1, %c0_2] : memref<32x128xf32, #tpu.memory_space<vmem>>, vector<32x128xf32>
    %cst = arith.constant dense<0.000000e+00> : vector<16x128xf32>
    %2 = tpu.matmul %0, %1, %cst {dimension_numbers = #tpu.dot_dimension_numbers<[1], [0], [0], [1], [0, 0, 1, 1], [], []>} : vector<16x32xf32>, vector<32x128xf32>, vector<16x128xf32> -> vector<16x128xf32>
    %c0_3 = arith.constant 0 : index
    %c0_4 = arith.constant 0 : index
    %3 = vector.load %arg3[%c0_3, %c0_4] : memref<1x128xf32, #tpu.memory_space<vmem>>, vector<1x128xf32>
    %4 = vector.broadcast %3 : vector<1x128xf32> to vector<16x128xf32>
    %5 = arith.addf %2, %4 : vector<16x128xf32>
    %6 = arith.mulf %5, %5 : vector<16x128xf32>
    %cst_5 = arith.constant dense<0.000000e+00> : vector<16xf32>
    %7 = vector.multi_reduction <add>, %6, %cst_5 [1] : vector<16x128xf32> to vector<16xf32>
    %8 = vector.shape_cast %7 : vector<16xf32> to vector<16x1xf32>
    %cst_6 = arith.constant 1.000000e-24 : f32
    %9 = vector.broadcast %cst_6 : f32 to vector<16x1xf32>
    %10 = arith.maximumf %8, %9 : vector<16x1xf32>
    %11 = math.rsqrt %10 : vector<16x1xf32>
    %12 = vector.broadcast %11 : vector<16x1xf32> to vector<16x128xf32>
    %13 = arith.mulf %5, %12 : vector<16x128xf32>
    %c0_7 = arith.constant 0 : index
    %c0_8 = arith.constant 0 : index
    %14 = vector.load %arg4[%c0_7, %c0_8] : memref<16x128xf32, #tpu.memory_space<vmem>>, vector<16x128xf32>
    tpu.vector_store %arg4[%c0_7, %c0_8], %13 {strides = array<i32>} : memref<16x128xf32, #tpu.memory_space<vmem>>, vector<16x128xf32>,
    return
  }
  func.func @transform_0(%arg0: i32) -> (i32, i32) {
    %c0_i32 = arith.constant 0 : i32
    %c0_i32_0 = arith.constant 0 : i32
    return %arg0, %c0_i32 : i32, i32
  }
  func.func @transform_1(%arg0: i32) -> (i32, i32) {
    %c0_i32 = arith.constant 0 : i32
    %c0_i32_0 = arith.constant 0 : i32
    %c0_i32_1 = arith.constant 0 : i32
    return %c0_i32, %c0_i32_0 : i32, i32
  }
  func.func @transform_2(%arg0: i32) -> (i32, i32) {
    %c0_i32 = arith.constant 0 : i32
    %c0_i32_0 = arith.constant 0 : i32
    %c0_i32_1 = arith.constant 0 : i32
    return %c0_i32, %c0_i32_0 : i32, i32
  }
  func.func @transform_3(%arg0: i32) -> (i32, i32) {
    %c0_i32 = arith.constant 0 : i32
    %c0_i32_0 = arith.constant 0 : i32
    return %arg0, %c0_i32 : i32, i32
  }
}

</mosaic_0001>

<llo_original>
// kernel: tpu_custom_call.1
$region0: #{tpu_custom_call.1}
  #allocation0 [shape = 'u32[]', space=smem, size = 0x4, offset = 0x4, fixed_abs, tag = 'smem constant byte address 0x4 - core index']
  #allocation1 [shape = 'u32[144,128]{1,0:T(1,128)}', space=vmem, size = 0x12000, scoped, tag = 'internal scratch']
  %s0 = inlined_call_operand.hbm [shape: f32[16,32], index: 0, kind: input, shape index: {}]
  %s1 = inlined_call_operand.hbm [shape: f32[32,128], index: 1, kind: input, shape index: {}]
  %s2 = inlined_call_operand.vmem [shape: f32[1,128], index: 2, kind: input, shape index: {}]
  %s3 = inlined_call_operand.hbm [shape: f32[16,128], index: 3, kind: output, shape index: {}]
  %s4 = sld [smem:[#allocation0]]
  $region30: #{tpu_custom_call.1} parent=0
    _
  %s6 = ssub.s32 1, %s4
  %s7 = scalar_select 0, %s6, %s4
  $region1: #{tpu_custom_call.1} parent=0
    #allocation2 [shape = 'u8[8192]{0}', space=vmem, size = 0x2000, scoped, tag = 'input window, operand 0, single buffered']
    #allocation3 [shape = 's32[1]{0}', space=sflag, size = 0x4, scoped, tag = 'scoped memory for tpu_custom_call.1']
    #allocation4 [shape = 's32[1]{0}', space=sflag, size = 0x4, scoped, tag = 'scoped memory for tpu_custom_call.1']
    #allocation5 [shape = 'u8[16384]{0}', space=vmem, size = 0x4000, scoped, tag = 'input window, operand 1, single buffered']
    #allocation6 [shape = 's32[1]{0}', space=sflag, size = 0x4, scoped, tag = 'scoped memory for tpu_custom_call.1']
    #allocation7 [shape = 'u8[8192]{0}', space=vmem, size = 0x2000, scoped, tag = 'output window, operand 0, single buffered']
    %8 = vsyncpa [#allocation3], 0
    %9 = vsyncpa [#allocation6], 0
    %10 = vsyncpa [#allocation4], 0
    // Predicated region
    $region2: #{tpu_custom_call.1} parent=1 // pred_check
      _
    $region3: #{tpu_custom_call.1} parent=1 // pred_check_branch
      %12 = sbr.rel (0) target = $region5
    $region4: #{tpu_custom_call.1} parent=1 // pred_region
      %s14 = ssub.s32 256, 256
      %15 = vsyncadd [#allocation3], %s14
      %s16 = sshll.u32 [#allocation2], 4
      %s17 = int_to_ptr.vmem [resolvable:$true] %s16
      %22 = dma.hbm_to_vmem [thread:$0]  %s0, 256, %s17, [#allocation3], 128, 128, 8
    $region5: #{tpu_custom_call.1} parent=1 // pred_fallthru
      _
    // Predicated region
    $region6: #{tpu_custom_call.1} parent=1 // pred_check
      _
    $region7: #{tpu_custom_call.1} parent=1 // pred_check_branch
      %24 = sbr.rel (0) target = $region9
    $region8: #{tpu_custom_call.1} parent=1 // pred_region
      %s26 = ssub.s32 512, 512
      %27 = vsyncadd [#allocation6], %s26
      %s28 = sshll.u32 [#allocation5], 4
      %s29 = int_to_ptr.vmem [resolvable:$true] %s28
      %34 = dma.hbm_to_vmem [thread:$0]  %s1, 512, %s29, [#allocation6], 128, 128, 8
    $region9: #{tpu_custom_call.1} parent=1 // pred_fallthru
      _
    // Predicated region
    $region10: #{tpu_custom_call.1} parent=1 // pred_check
      _
    $region11: #{tpu_custom_call.1} parent=1 // pred_check_branch
      %36 = sbr.rel (0) target = $region13
    $region12: #{tpu_custom_call.1} parent=1 // pred_region
      _
    $region13: #{tpu_custom_call.1} parent=1 // pred_fallthru
      _
    // Predicated region
    $region14: #{tpu_custom_call.1} parent=1 // pred_check
      _
    $region15: #{tpu_custom_call.1} parent=1 // pred_check_branch
      %38 = sbr.rel (0) target = $region17
    $region16: #{tpu_custom_call.1} parent=1 // pred_region
      %39 = dma.done [#allocation3], 256
    $region17: #{tpu_custom_call.1} parent=1 // pred_fallthru
      _
    // Predicated region
    $region18: #{tpu_custom_call.1} parent=1 // pred_check
      _
    $region19: #{tpu_custom_call.1} parent=1 // pred_check_branch
      %41 = sbr.rel (0) target = $region21
    $region20: #{tpu_custom_call.1} parent=1 // pred_region
      %42 = dma.done [#allocation6], 512
    $region21: #{tpu_custom_call.1} parent=1 // pred_fallthru
      _
    %v43 = vld [vmem:[#allocation2] sm:$0xff]
    %v44 = vld [vmem:[#allocation2 + $0x8] sm:$0xff]
    %v45 = vld [vmem:[#allocation5] sm:$0xff]
    %v46 = vld [vmem:[#allocation5 + $0x8] sm:$0xff]
    %v47 = vld [vmem:[#allocation5 + $0x10] sm:$0xff]
    %v48 = vld [vmem:[#allocation5 + $0x18] sm:$0xff]
    %v49 = vld [vmem:[%s2] sm:$0x1]
    %v51 = vlaneseq
    %v52 = vshrl.u32 %v51, 7
    %v53 = vsub.s32 0, %v52
    %v54 = vrot.slane %v49, %v53
    %vm56 = vcmask 261120
    %v58 = vsel %vm56, %v43, 0
    %v61 = vsel %vm56, %v44, 0
    %63 = vmatprep.subr.mxu0 0.0
    %64 = vmatpush1.msra.mxu0 %v45
    %65 = vmatprep.subr.mxu0 0.0
    %66 = vmatpush1.msra.mxu0 %v46
    %67 = vmatprep.subr.mxu0 0.0
    %68 = vmatpush1.msra.mxu0 %v47
    %69 = vmatprep.subr.mxu0 0.0
    %70 = vmatpush1.msra.mxu0 %v48
    %71 = vmatprep.subr.mxu0 0.0
    %72 = vmatpush1.msra.mxu0 0.0
    %73 = vmatprep.subr.mxu0 0.0
    %74 = vmatpush1.msra.mxu0 0.0
    %75 = vmatprep.subr.mxu0 0.0
    %76 = vmatpush1.msra.mxu0 0.0
    %77 = vmatprep.subr.mxu0 0.0
    %78 = vmatpush1.msra.mxu0 0.0
    %79 = vmatprep.subr.mxu0 0.0
    %80 = vmatpush1.msra.mxu0 0.0
    %81 = vmatprep.subr.mxu0 0.0
    %82 = vmatpush1.msra.mxu0 0.0
    %83 = vmatprep.subr.mxu0 0.0
    %84 = vmatpush1.msra.mxu0 0.0
    %85 = vmatprep.subr.mxu0 0.0
    %86 = vmatpush1.msra.mxu0 0.0
    %87 = vmatprep.subr.mxu0 0.0
    %88 = vmatpush1.msra.mxu0 0.0
    %89 = vmatprep.subr.mxu0 0.0
    %90 = vmatpush1.msra.mxu0 0.0
    %91 = vmatprep.subr.mxu0 0.0
    %92 = vmatpush1.msra.mxu0 0.0
    %93 = vmatprep.subr.mxu0 0.0
    %94 = vmatpush1.msra.mxu0 0.0
    %95 = vmatprep.subr.mxu0 0.0
    %96 = vmatpush1.msra.mxu0 0.0
    %97 = vmatprep.subr.mxu0 0.0
    %98 = vmatpush1.msra.mxu0 0.0
    %99 = vmatprep.subr.mxu0 0.0
    %100 = vmatpush1.msra.mxu0 0.0
    %101 = vmatprep.subr.mxu0 0.0
    %102 = vmatpush1.msra.mxu0 0.0
    %103 = vmatprep.subr.mxu0 0.0
    %104 = vmatpush1.msra.mxu0 0.0
    %105 = vmatprep.subr.mxu0 0.0
    %106 = vmatpush1.msra.mxu0 0.0
    %107 = vmatprep.subr.mxu0 0.0
    %108 = vmatpush1.msra.mxu0 0.0
    %109 = vmatprep.subr.mxu0 0.0
    %110 = vmatpush1.msra.mxu0 0.0
    %111 = vmatprep.subr.mxu0 0.0
    %112 = vmatpush1.msra.mxu0 0.0
    %113 = vmatprep.subr.mxu0 0.0
    %114 = vmatpush1.msra.mxu0 0.0
    %115 = vmatprep.subr.mxu0 0.0
    %116 = vmatpush1.msra.mxu0 0.0
    %117 = vmatprep.subr.mxu0 0.0
    %118 = vmatpush1.msra.mxu0 0.0
    %119 = vmatprep.subr.mxu0 0.0
    %120 = vmatpush1.msra.mxu0 0.0
    %121 = vmatprep.subr.mxu0 0.0
    %122 = vmatpush1.msra.mxu0 0.0
    %123 = vmatprep.subr.mxu0 0.0
    %124 = vmatpush1.msra.mxu0 0.0
    %125 = vmatprep.subr.mxu0 0.0
    %126 = vmatpush1.msra.mxu0 0.0
    %127 = vmatprep.mubr.f32.mxu0 0.0
    %128 = vmatmul.mubr.f32.gmra.mrb[0].mxu0 %v58
    %v129 = vpop.f32.mrb[0].mxu0
    %v130 = vadd.f32 %v54, %v129
    %v131 = vpop.f32.mrb[0].mxu0
    %132 = vmatprep.mubr.f32.mxu0 0.0
    %133 = vmatmul.mubr.f32.gmra.mrb[0].mxu0 %v61
    %v134 = vpop.f32.mrb[0].mxu0
    %v135 = vadd.f32 %v54, %v134
    %v136 = vpop.f32.mrb[0].mxu0
    %137 = vdwg.mxu0
    %v138 = vmul.f32 %v130, %v130
    %v139 = vmul.f32 %v135, %v135
    %140 = vadd.xlane.f32.xlu0 %v138
    %v141 = vpop.xlane.xlu0 %140
    %142 = vadd.xlane.f32.xlu0 %v139
    %v143 = vpop.xlane.xlu0 %142
    %v144 = vmax.f32 %v141, 1e-24
    %v145 = vmax.f32 %v143, 1e-24
    %v146 = vrsqrt.pop %v144
    %v147 = vrsqrt.pop %v145
    %v148 = vmul.f32 %v130, %v146
    %v149 = vmul.f32 %v135, %v147
    %150 = vst [vmem:[#allocation7] sm:$0xff] %v148
    %151 = vst [vmem:[#allocation7 + $0x8] sm:$0xff] %v149
    // Predicated region
    $region22: #{tpu_custom_call.1} parent=1 // pred_check
      _
    $region23: #{tpu_custom_call.1} parent=1 // pred_check_branch
      %153 = sbr.rel (0) target = $region25
    $region24: #{tpu_custom_call.1} parent=1 // pred_region
      %s155 = ssub.s32 256, 256
      %156 = vsyncadd [#allocation4], %s155
      %s157 = sshll.u32 [#allocation7], 4
      %s158 = int_to_ptr.vmem [resolvable:$true] %s157
      %163 = dma.vmem_to_hbm [thread:$0]  %s158, 256, %s3, [#allocation4], 128, 128, 8
    $region25: #{tpu_custom_call.1} parent=1 // pred_fallthru
      _
    // Predicated region
    $region26: #{tpu_custom_call.1} parent=1 // pred_check
      _
    $region27: #{tpu_custom_call.1} parent=1 // pred_check_branch
      %165 = sbr.rel (0) target = $region29
    $region28: #{tpu_custom_call.1} parent=1 // pred_region
      %166 = dma.done [#allocation4], 256
    $region29: #{tpu_custom_call.1} parent=1 // pred_fallthru
      _
    %167 = vsyncpa [#allocation3], 1
    %168 = vsyncpa [#allocation6], 1
    %169 = vsyncpa [#allocation4], 1

</llo_original>
